<compile_context>
chip_gen: v5e
topology: v5e:2x2
jax: 0.10.0
libtpu: 0.0.40
codegen_flags: <defaults>
</compile_context>

<pallas_src>
import jax
import jax.numpy as jnp
from jax.experimental import pallas as pl
from jax.experimental.pallas import tpu as pltpu


# ----------------------------- kernel body ---------------------------------


def _linear_kernel(x_ref, w_ref, b_ref, o_ref):
    # x_ref: (TB, L)  w_ref: (L, TN)  b_ref: (1, TN)  o_ref: (TB, TN)
    acc = jnp.dot(x_ref[...], w_ref[...], preferred_element_type=jnp.float32)
    o_ref[...] = (acc + b_ref[...]).astype(o_ref.dtype)


# --------------------------- tile-size heuristics ---------------------------


def _round_up(a, m):
    return ((a + m - 1) // m) * m


def _vmem_info():
    """(physical VMEM per core, working-set budget for the pipeline)."""
    try:
        cap = int(pltpu.get_tpu_info().vmem_capacity_bytes)
    except Exception:
        cap = 64 * 1024 * 1024  # conservative fallback: v7x per-TC VMEM
    # Keep the double-buffered working set well under physical VMEM
    # (v7x: 64 MiB -> ~28 MiB budget; v5e/v6e: also capped at 28 MiB).
    budget = min(int(cap * 0.45), 28 * 1024 * 1024)
    return cap, budget


def _footprint_bytes(TB, TN, L, in_sz, out_sz):
    # Conservatively assume every operand block is double-buffered.
    return (2 * TB * L * in_sz        # x tile
            + 2 * L * TN * in_sz      # weight tile
            + 2 * TN * 4              # bias tile (f32)
            + 2 * TB * TN * out_sz)   # output tile


def _pick_tiles(B, L, N, in_sz, out_sz, budget):
    """Return (TB, TN, Bp, Np): TB % 8 == 0, TN % 128 == 0, TN | Np, TB | Bp."""
    # --- batch tile: as large as reasonable (x streamed once when TB == Bp) ---
    TB = min(_round_up(B, 8), 512)
    while TB > 8 and _footprint_bytes(TB, 128, L, in_sz, out_sz) > budget:
        TB = max(8, _round_up(TB // 2, 8))

    # --- feature tile from the remaining VMEM budget ---
    fixed = 2 * TB * L * in_sz
    per_tn = 2 * L * in_sz + 2 * 4 + 2 * TB * out_sz
    if budget > fixed:
        tn_max = max(128, ((budget - fixed) // per_tn // 128) * 128)
    else:
        # TODO(synk): tile the contraction (input_len) axis for very large L;
        # for now fall back to the minimum lane-dense tile.
        tn_max = 128

    np128 = _round_up(N, 128)
    inherent_waste = np128 - N
    allowed_waste = max(inherent_waste, (N + 11) // 12)  # allow ~8% feature padding
    TN = max(128, (min(tn_max, np128) // 128) * 128)
    while TN > 128 and _round_up(N, TN) - N > allowed_waste:
        TN -= 128
    Np = _round_up(N, TN)
    Bp = _round_up(B, TB)

    # --- v7x megacore: guarantee >= 2 parallel blocks in the grid ---
    if (Np // TN) * (Bp // TB) < 2 and Np >= 256:
        start = ((Np // 2) // 128) * 128
        for cand in range(start, 127, -128):
            if Np % cand == 0:
                TN = cand
                break
    return TB, TN, Bp, _round_up(N, TN)


# ------------------------------- wrapper ------------------------------------


def feature_encoder_1d_forward(x, w_t, b, *, stream_dtype=None):
    """x: (B, L); w_t: (L, L*D) (transposed nn.Linear weight); b: (L*D,).

    Returns (B, L, D).  `stream_dtype` (e.g. jnp.bfloat16) optionally narrows
    the dtype x / W are streamed from HBM in; accumulation stays f32 and the
    output keeps x.dtype.
    """
    B, L = x.shape
    assert w_t.shape[0] == L, "weight/input feature mismatch"
    N = w_t.shape[1]
    assert N % L == 0, "out_features must be divisible by input_len"
    d_model = N // L

    out_dtype = x.dtype
    if stream_dtype is not None:
        x = x.astype(stream_dtype)
        w_t = w_t.astype(stream_dtype)
    b2d = b.astype(jnp.float32).reshape(1, N)

    in_sz = jnp.dtype(x.dtype).itemsize
    out_sz = jnp.dtype(out_dtype).itemsize
    cap, budget = _vmem_info()

    TB, TN, Bp, Np = _pick_tiles(B, L, N, in_sz, out_sz, budget)

    # pad batch (sublane-dense, multiple of TB) and feature dim (multiple of TN)
    if Bp != B:
        x = jnp.pad(x, ((0, Bp - B), (0, 0)))
    if Np != N:
        w_t = jnp.pad(w_t, ((0, 0), (0, Np - N)))
        b2d = jnp.pad(b2d, ((0, 0), (0, Np - N)))

    n_feat, n_batch = Np // TN, Bp // TB
    grid = (n_feat, n_batch)  # feature outer: W tiles streamed once each

    footprint = _footprint_bytes(TB, TN, L, in_sz, out_sz)
    vmem_limit = int(min(max(footprint * 1.5, 32 * 1024 * 1024), cap * 0.9))

    # honest byte count: x is re-streamed once per feature tile unless the
    # batch fits a single tile (constant block index -> fetched once).
    x_streams = n_feat if n_batch > 1 else 1
    bytes_accessed = int(x_streams * Bp * L * in_sz
                         + L * Np * in_sz
                         + Np * 4
                         + Bp * Np * out_sz)

    y = pl.pallas_call(
        _linear_kernel,
        out_shape=jax.ShapeDtypeStruct((Bp, Np), out_dtype),
        grid_spec=pl.GridSpec(
            grid=grid,
            in_specs=[
                pl.BlockSpec((TB, L), lambda j, i: (i, 0)),   # x
                pl.BlockSpec((L, TN), lambda j, i: (0, j)),   # W_t
                pl.BlockSpec((1, TN), lambda j, i: (0, j)),   # bias
            ],
            out_specs=pl.BlockSpec((TB, TN), lambda j, i: (i, j)),
        ),
        compiler_params=pltpu.CompilerParams(
            dimension_semantics=("parallel", "parallel"),
            vmem_limit_bytes=vmem_limit,
        ),
        cost_estimate=pl.CostEstimate(
            flops=2 * Bp * L * Np,
            transcendentals=0,
            bytes_accessed=bytes_accessed,
        ),
    )(x, w_t, b2d)

    if Bp != B or Np != N:
        y = y[:B, :N]
    # equivalent of torch .view(_b, _l, d_model)
    return y.reshape(B, L, d_model)


def init_params(key, input_len, d_model, dtype=jnp.float32):
    """Init mirroring nn.Linear(input_len, input_len*d_model):
    weight (out, in) ~ U(-k, k), bias (out,) ~ U(-k, k), k = 1/sqrt(in)."""
    out_features = input_len * d_model
    kw, kb = jax.random.split(key)
    bound = 1.0 / jnp.sqrt(jnp.array(input_len, dtype))
    weight = jax.random.uniform(
        kw, (out_features, input_len), dtype, minval=-bound, maxval=bound
    )
    bias = jax.random.uniform(
        kb, (out_features,), dtype, minval=-bound, maxval=bound
    )
    return weight.T, bias  # store transposed for (B,L) @ (L,N)


if __name__ == "__main__":
    # small shapes: batch=2, input_len=8, d_model=32 -> out_features=256
    B, L, D = 2, 8, 32
    key = jax.random.PRNGKey(0)
    kx, kp = jax.random.split(key)

    x = jax.random.normal(kx, (B, L), jnp.float32)
    w_t, b = init_params(kp, L, D)
    ref = (x @ w_t + b).reshape(B, L, D)

    # f32 path: exact against the f32 reference
    out = jax.block_until_ready(feature_encoder_1d_forward(x, w_t, b))
    assert out.shape == (B, L, D)
    assert jnp.allclose(out, ref, atol=1e-5, rtol=1e-5)

    # bf16-streaming path (halves HBM traffic on this bandwidth-bound op)
    out_bf16 = jax.block_until_ready(
        feature_encoder_1d_forward(x, w_t, b, stream_dtype=jnp.bfloat16)
    )
    assert out_bf16.shape == (B, L, D)
    assert jnp.allclose(out_bf16, ref, atol=5e-2, rtol=5e-2)

    print("KERNEL_OK")
</pallas_src>

<mosaic_0001>
module attributes {stable_mosaic.version = 11 : i64} {
  func.func @_linear_kernel(%arg0: i32, %arg1: i32, %arg2: memref<8x8xf32, #tpu.memory_space<vmem>>, %arg3: memref<8x128xf32, #tpu.memory_space<vmem>>, %arg4: memref<1x128xf32, #tpu.memory_space<vmem>>, %arg5: memref<8x128xf32, #tpu.memory_space<vmem>>) attributes {dimension_semantics = [#tpu.dimension_semantics<parallel>, #tpu.dimension_semantics<parallel>], iteration_bounds = array<i64: 2, 1>, scalar_prefetch = 0 : i64, scratch_operands = 0 : i64, tpu.core_type = #tpu.core_type<tc>, window_params = [{transform_indices = @transform_0, window_bounds = array<i64: 8, 8>}, {transform_indices = @transform_1, window_bounds = array<i64: 8, 128>}, {transform_indices = @transform_2, window_bounds = array<i64: 1, 128>}, {transform_indices = @transform_3, window_bounds = array<i64: 8, 128>}]} {
    %c0 = arith.constant 0 : index
    %c0_0 = arith.constant 0 : index
    %0 = vector.load %arg2[%c0, %c0_0] : memref<8x8xf32, #tpu.memory_space<vmem>>, vector<8x8xf32>
    %c0_1 = arith.constant 0 : index
    %c0_2 = arith.constant 0 : index
    %1 = vector.load %arg3[%c0_1, %c0_2] : memref<8x128xf32, #tpu.memory_space<vmem>>, vector<8x128xf32>
    %cst = arith.constant dense<0.000000e+00> : vector<8x128xf32>
    %2 = tpu.matmul %0, %1, %cst {dimension_numbers = #tpu.dot_dimension_numbers<[1], [0], [0], [1], [0, 0, 1, 1], [], []>} : vector<8x8xf32>, vector<8x128xf32>, vector<8x128xf32> -> vector<8x128xf32>
    %c0_3 = arith.constant 0 : index
    %c0_4 = arith.constant 0 : index
    %3 = vector.load %arg4[%c0_3, %c0_4] : memref<1x128xf32, #tpu.memory_space<vmem>>, vector<1x128xf32>
    %4 = vector.broadcast %3 : vector<1x128xf32> to vector<8x128xf32>
    %5 = arith.addf %2, %4 : vector<8x128xf32>
    %c0_5 = arith.constant 0 : index
    %c0_6 = arith.constant 0 : index
    %6 = vector.load %arg5[%c0_5, %c0_6] : memref<8x128xf32, #tpu.memory_space<vmem>>, vector<8x128xf32>
    tpu.vector_store %arg5[%c0_5, %c0_6], %5 {strides = array<i32>} : memref<8x128xf32, #tpu.memory_space<vmem>>, vector<8x128xf32>,
    return
  }
  func.func @transform_0(%arg0: i32, %arg1: i32) -> (i32, i32) {
    %c0_i32 = arith.constant 0 : i32
    %c0_i32_0 = arith.constant 0 : i32
    return %arg1, %c0_i32 : i32, i32
  }
  func.func @transform_1(%arg0: i32, %arg1: i32) -> (i32, i32) {
    %c0_i32 = arith.constant 0 : i32
    %c0_i32_0 = arith.constant 0 : i32
    return %c0_i32, %arg0 : i32, i32
  }
  func.func @transform_2(%arg0: i32, %arg1: i32) -> (i32, i32) {
    %c0_i32 = arith.constant 0 : i32
    %c0_i32_0 = arith.constant 0 : i32
    return %c0_i32, %arg0 : i32, i32
  }
  func.func @transform_3(%arg0: i32, %arg1: i32) -> (i32, i32) {
    %c0_i32 = arith.constant 0 : i32
    return %arg1, %arg0 : i32, i32
  }
}

</mosaic_0001>

<llo_original>
// kernel: tpu_custom_call.1
$region0: #{tpu_custom_call.1}
  #allocation0 [shape = 'u32[]', space=smem, size = 0x4, offset = 0x4, fixed_abs, tag = 'smem constant byte address 0x4 - core index']
  #allocation1 [shape = 'u32[72,128]{1,0:T(1,128)}', space=vmem, size = 0x9000, scoped, tag = 'internal scratch']
  %s0 = inlined_call_operand.hbm [shape: f32[8,8], index: 0, kind: input, shape index: {}]
  %s1 = inlined_call_operand.hbm [shape: f32[8,256], index: 1, kind: input, shape index: {}]
  %s2 = inlined_call_operand.hbm [shape: f32[1,256], index: 2, kind: input, shape index: {}]
  %s3 = inlined_call_operand.hbm [shape: f32[8,256], index: 3, kind: output, shape index: {}]
  %s4 = sld [smem:[#allocation0]]
  $region57: #{tpu_custom_call.1} parent=0
    _
  %s6 = ssub.s32 1, %s4
  %s7 = scalar_select 0, %s6, %s4
  $region1: #{tpu_custom_call.1} parent=0
    #allocation2 [shape = 'u8[4096]{0}', space=vmem, size = 0x1000, scoped, tag = 'input window, operand 0, single buffered']
    #allocation3 [shape = 's32[2]{0}', space=sflag, size = 0x8, scoped, tag = 'scoped memory for tpu_custom_call.1']
    #allocation4 [shape = 's32[2]{0}', space=sflag, size = 0x8, scoped, tag = 'scoped memory for tpu_custom_call.1']
    #allocation5 [shape = 'u8[8192]{0}', space=vmem, size = 0x2000, scoped, tag = 'input window, operand 1']
    #allocation6 [shape = 's32[2]{0}', space=sflag, size = 0x8, scoped, tag = 'scoped memory for tpu_custom_call.1']
    #allocation7 [shape = 'u8[1024]{0}', space=vmem, size = 0x400, scoped, tag = 'input window, operand 2']
    #allocation8 [shape = 'u8[8192]{0}', space=vmem, size = 0x2000, scoped, tag = 'output window, operand 0']
    %8 = vsyncpa [#allocation3], 0
    %9 = vsyncpa [#allocation6], 0
    %s10 = scalar_lea.sflag [#allocation6], 1
    %11 = vsyncpa %s10, 0
    %12 = vsyncpa [#allocation4], 0
    %s13 = scalar_lea.sflag [#allocation4], 1
    %14 = vsyncpa %s13, 0
    loop: start=0, step=1, limit=4
    $region2: #{tpu_custom_call.1} parent=1 // loop_pre_header
      _
    $region3: #{tpu_custom_call.1} parent=1 // loop_header
      %s16 = sphi 0, %s20
      %p17 = scmp.ge.s32.totalorder %s16, 4
      %s23 = sphi 0, %s35
      %s24 = sphi 0, %s31
      %s25 = sphi 0, %s23
      %s26 = sphi 0, %s24
      %s27 = sphi 0, %s25
      %s28 = sphi 0, %s26
      %s38 = sphi 0, %s40
      %s41 = sphi 0, %s38
      %s42 = sphi 0, %s41
      %s58 = sphi 0, %s42
      %s64 = sphi 0, %s66
      %s67 = sphi 0, %s64
      %s68 = sphi 0, %s67
      %s84 = sphi 0, %s68
      %s90 = sphi 0, %s92
      %s93 = sphi 0, %s90
      %s94 = sphi 0, %s93
      %s110 = sphi 0, %s94
      %s118 = sphi 0, %s120
      %s121 = sphi 0, %s118
      %s122 = sphi 0, %s121
      %s138 = sphi 0, %s122
    $region4: #{tpu_custom_call.1} parent=1 // loop_header_branch
      %19 = sbr.rel (%p17) target = $region8
    $region5: #{tpu_custom_call.1} parent=1 // loop_body
      %s21 = ssub.s32 %s16, 1
      %s22 = ssub.s32 %s16, 2
      %s29 = sadd.s32 1, %s24
      %p30 = scmp.ge.s32.totalorder %s29, 1
      %s31 = scalar_select %p30, 0, %s29
      %s32 = sadd.s32 1, %s23
      %s33 = scalar_select %p30, %s32, %s23
      %p34 = scmp.ge.s32.totalorder %s33, 2
      %s35 = scalar_select %p34, 0, %s33
      %s36 = ssub.s32 %s24, %s31
      %p37 = scmp.eq.s32.totalorder %s36, 0
      %s39 = sadd.s32 %s38, 1
      %s40 = scalar_select %p37, %s38, %s39
      %p43 = pneg %p37
      %p44 = scmp.eq.s32.totalorder %s16, 1
      %p45 = por %p43, %p44
      %p46 = scmp.ne.s32.totalorder %s38, %s41
      %p47 = scmp.eq.s32.totalorder %s16, 0
      %p48 = por %p46, %p47
      %p49 = scmp.ne.s32.totalorder %s38, %s41
      %p50 = scmp.eq.s32.totalorder %s21, 1
      %p51 = por %p49, %p50
      %p52 = scmp.ne.s32.totalorder %s41, %s42
      %p53 = scmp.eq.s32.totalorder %s21, 0
      %p54 = por %p52, %p53
      %p55 = scmp.ne.s32.totalorder %s41, %s42
      %p56 = scmp.eq.s32.totalorder %s22, 1
      %p57 = por %p55, %p56
      %p59 = scmp.ne.s32.totalorder %s42, %s58
      %p60 = scmp.eq.s32.totalorder %s22, 0
      %p61 = por %p59, %p60
      %s62 = ssub.s32 %s23, %s35
      %p63 = scmp.eq.s32.totalorder %s62, 0
      %s65 = sadd.s32 %s64, 1
      %s66 = scalar_select %p63, %s64, %s65
      %p69 = pneg %p63
      %p70 = scmp.eq.s32.totalorder %s16, 1
      %p71 = por %p69, %p70
      %p72 = scmp.ne.s32.totalorder %s64, %s67
      %p73 = scmp.eq.s32.totalorder %s16, 0
      %p74 = por %p72, %p73
      %p75 = scmp.ne.s32.totalorder %s64, %s67
      %p76 = scmp.eq.s32.totalorder %s21, 1
      %p77 = por %p75, %p76
      %p78 = scmp.ne.s32.totalorder %s67, %s68
      %p79 = scmp.eq.s32.totalorder %s21, 0
      %p80 = por %p78, %p79
      %p81 = scmp.ne.s32.totalorder %s67, %s68
      %p82 = scmp.eq.s32.totalorder %s22, 1
      %p83 = por %p81, %p82
      %p85 = scmp.ne.s32.totalorder %s68, %s84
      %p86 = scmp.eq.s32.totalorder %s22, 0
      %p87 = por %p85, %p86
      %s88 = ssub.s32 %s23, %s35
      %p89 = scmp.eq.s32.totalorder %s88, 0
      %s91 = sadd.s32 %s90, 1
      %s92 = scalar_select %p89, %s90, %s91
      %p95 = pneg %p89
      %p96 = scmp.eq.s32.totalorder %s16, 1
      %p97 = por %p95, %p96
      %p98 = scmp.ne.s32.totalorder %s90, %s93
      %p99 = scmp.eq.s32.totalorder %s16, 0
      %p100 = por %p98, %p99
      %p101 = scmp.ne.s32.totalorder %s90, %s93
      %p102 = scmp.eq.s32.totalorder %s21, 1
      %p103 = por %p101, %p102
      %p104 = scmp.ne.s32.totalorder %s93, %s94
      %p105 = scmp.eq.s32.totalorder %s21, 0
      %p106 = por %p104, %p105
      %p107 = scmp.ne.s32.totalorder %s93, %s94
      %p108 = scmp.eq.s32.totalorder %s22, 1
      %p109 = por %p107, %p108
      %p111 = scmp.ne.s32.totalorder %s94, %s110
      %p112 = scmp.eq.s32.totalorder %s22, 0
      %p113 = por %p111, %p112
      %s114 = ssub.s32 %s24, %s31
      %s115 = ssub.s32 %s23, %s35
      %s116 = sor.u32 %s114, %s115
      %p117 = scmp.eq.s32.totalorder %s116, 0
      %s119 = sadd.s32 %s118, 1
      %s120 = scalar_select %p117, %s118, %s119
      %p123 = pneg %p117
      %p124 = scmp.eq.s32.totalorder %s16, 1
      %p125 = por %p123, %p124
      %p126 = scmp.ne.s32.totalorder %s118, %s121
      %p127 = scmp.eq.s32.totalorder %s16, 0
      %p128 = por %p126, %p127
      %p129 = scmp.ne.s32.totalorder %s118, %s121
      %p130 = scmp.eq.s32.totalorder %s21, 1
      %p131 = por %p129, %p130
      %p132 = scmp.ne.s32.totalorder %s121, %s122
      %p133 = scmp.eq.s32.totalorder %s21, 0
      %p134 = por %p132, %p133
      %p135 = scmp.ne.s32.totalorder %s121, %s122
      %p136 = scmp.eq.s32.totalorder %s22, 1
      %p137 = por %p135, %p136
      %p139 = scmp.ne.s32.totalorder %s122, %s138
      %p140 = scmp.eq.s32.totalorder %s22, 0
      %p141 = por %p139, %p140
      %p142 = scmp.le.s32.totalorder 1, %s16
      %p143 = scmp.lt.s32.totalorder %s16, 3
      %p144 = pnand %p142, %p143
      %p145 = pneg %p144
      // Predicated region
      $region9: #{tpu_custom_call.1} parent=5 // pred_check
        _
      $region10: #{tpu_custom_call.1} parent=5 // pred_check_branch
        %147 = sbr.rel (%p144) target = $region12
      $region11: #{tpu_custom_call.1} parent=5 // pred_region
        %s148 = ssub.s32 %s16, 1
        // Predicated region
        $region13: #{tpu_custom_call.1} parent=11 // pred_check
          %p149 = pneg %p54
        $region14: #{tpu_custom_call.1} parent=11 // pred_check_branch
          %151 = sbr.rel (%p149) target = $region16
        $region15: #{tpu_custom_call.1} parent=11 // pred_region
          %153 = vsyncadd [#allocation3], 0
          %s154 = smul.addr %s26, 8
          %s155 = scalar_lea.hbm %s0, %s154
          %s157 = sshll.u32 %s155, 4
          %s158 = int_to_ptr.hbm [resolvable:$true] %s157
          %s159 = sshll.u32 [#allocation2], 4
          %s160 = int_to_ptr.vmem [resolvable:$true] %s159
          %162 = dma.hbm_to_vmem [thread:$0]  %s158, 128, %s160, [#allocation3]
        $region16: #{tpu_custom_call.1} parent=11 // pred_fallthru
          _
      $region12: #{tpu_custom_call.1} parent=5 // pred_fallthru
        _
      %p163 = scmp.lt.s32.totalorder %s16, 2
      // Predicated region
      $region17: #{tpu_custom_call.1} parent=5 // pred_check
        %p164 = pneg %p163
      $region18: #{tpu_custom_call.1} parent=5 // pred_check_branch
        %166 = sbr.rel (%p164) target = $region20
      $region19: #{tpu_custom_call.1} parent=5 // pred_region
        // Predicated region
        $region21: #{tpu_custom_call.1} parent=19 // pred_check
          %p167 = pneg %p74
        $region22: #{tpu_custom_call.1} parent=19 // pred_check_branch
          %169 = sbr.rel (%p167) target = $region24
        $region23: #{tpu_custom_call.1} parent=19 // pred_region
          %s170 = sand.u32 %s16, 1
          %s171 = scalar_lea.sflag [#allocation6], %s170
          %s172 = sand.u32 %s64, 1
          %s173 = smul.addr %s172, 8
          %s174 = scalar_lea.vmem [#allocation5], %s173
          %176 = vsyncadd %s171, 0
          %s177 = smul.addr %s23, 8
          %s178 = scalar_lea.hbm %s1, %s177
          %s180 = sshll.u32 %s178, 4
          %s181 = int_to_ptr.hbm [resolvable:$true] %s180
          %s182 = sshll.u32 %s174, 4
          %s183 = int_to_ptr.vmem [resolvable:$true] %s182
          %185 = dma.hbm_to_vmem [thread:$0]  %s181, 128, %s183, %s171
        $region24: #{tpu_custom_call.1} parent=19 // pred_fallthru
          _
        // Predicated region
        $region25: #{tpu_custom_call.1} parent=19 // pred_check
          %p186 = pneg %p100
        $region26: #{tpu_custom_call.1} parent=19 // pred_check_branch
          %188 = sbr.rel (%p186) target = $region28
        $region27: #{tpu_custom_call.1} parent=19 // pred_region
          %s189 = sand.u32 %s16, 1
          %s190 = scalar_lea.sflag [#allocation6], %s189
          %s191 = sand.u32 %s90, 1
          %s192 = scalar_lea.vmem [#allocation7], %s191
          %194 = vsyncadd %s190, 0
          %s195 = scalar_lea.hbm %s2, %s23
          %s197 = sshll.u32 %s195, 4
          %s198 = int_to_ptr.hbm [resolvable:$true] %s197
          %s199 = sshll.u32 %s192, 4
          %s200 = int_to_ptr.vmem [resolvable:$true] %s199
          %202 = dma.hbm_to_vmem [thread:$0]  %s198, 16, %s200, %s190
        $region28: #{tpu_custom_call.1} parent=19 // pred_fallthru
          _
      $region20: #{tpu_custom_call.1} parent=5 // pred_fallthru
        _
      %p203 = scmp.le.s32.totalorder 1, %s16
      %p204 = scmp.lt.s32.totalorder %s16, 3
      %p205 = pnand %p203, %p204
      %p206 = pneg %p205
      // Predicated region
      $region29: #{tpu_custom_call.1} parent=5 // pred_check
        _
      $region30: #{tpu_custom_call.1} parent=5 // pred_check_branch
        %208 = sbr.rel (%p205) target = $region32
      $region31: #{tpu_custom_call.1} parent=5 // pred_region
        %s209 = ssub.s32 %s16, 1
        // Predicated region
        $region33: #{tpu_custom_call.1} parent=31 // pred_check
          %p210 = pneg %p54
        $region34: #{tpu_custom_call.1} parent=31 // pred_check_branch
          %212 = sbr.rel (%p210) target = $region36
        $region35: #{tpu_custom_call.1} parent=31 // pred_region
          %214 = dma.done [#allocation3], 128
        $region36: #{tpu_custom_call.1} parent=31 // pred_fallthru
          _
        %s215 = sand.u32 %s21, 1
        %s216 = scalar_lea.sflag [#allocation6], %s215
        %s217 = sand.u32 %s67, 1
        %s218 = smul.addr %s217, 8
        %s219 = scalar_lea.vmem [#allocation5], %s218
        // Predicated region
        $region37: #{tpu_custom_call.1} parent=31 // pred_check
          %p220 = pneg %p80
        $region38: #{tpu_custom_call.1} parent=31 // pred_check_branch
          %222 = sbr.rel (%p220) target = $region40
        $region39: #{tpu_custom_call.1} parent=31 // pred_region
          %224 = dma.done %s216, 128
        $region40: #{tpu_custom_call.1} parent=31 // pred_fallthru
          _
        %s225 = sand.u32 %s21, 1
        %s226 = scalar_lea.sflag [#allocation6], %s225
        %s227 = sand.u32 %s93, 1
        %s228 = scalar_lea.vmem [#allocation7], %s227
        // Predicated region
        $region41: #{tpu_custom_call.1} parent=31 // pred_check
          %p229 = pneg %p106
        $region42: #{tpu_custom_call.1} parent=31 // pred_check_branch
          %231 = sbr.rel (%p229) target = $region44
        $region43: #{tpu_custom_call.1} parent=31 // pred_region
          %233 = dma.done %s226, 16
        $region44: #{tpu_custom_call.1} parent=31 // pred_fallthru
          _
        %p234 = pneg %p54
        %p235 = pneg %p51
        %s236 = sand.u32 %s21, 1
        %s237 = scalar_lea.sflag [#allocation6], %s236
        %s238 = sand.u32 %s67, 1
        %s239 = smul.addr %s238, 8
        %s240 = scalar_lea.vmem [#allocation5], %s239
        %p241 = pneg %p80
        %p242 = pneg %p77
        %s243 = sand.u32 %s21, 1
        %s244 = scalar_lea.sflag [#allocation6], %s243
        %s245 = sand.u32 %s93, 1
        %s246 = scalar_lea.vmem [#allocation7], %s245
        %p247 = pneg %p106
        %p248 = pneg %p103
        %p249 = pneg %p134
        %p250 = pneg %p131
        %s251 = sand.u32 %s121, 1
        %s252 = scalar_lea.sflag [#allocation4], %s251
        %s253 = sand.u32 %s121, 1
        %s254 = smul.addr %s253, 8
        %s255 = scalar_lea.vmem [#allocation8], %s254
        %v256 = vld [vmem:[#allocation2] sm:$0xff]
        %v257 = vld [vmem:[%s219] sm:$0xff]
        %v258 = vld [vmem:[%s228] sm:$0x1]
        %v260 = vperm.slane %v258, 0
        %vm262 = vcmask 64512
        %v264 = vsel %vm262, %v256, 0
        %266 = vmatpush.msra.mxu0 0.0
        %267 = vmatpush.msra.mxu0 0.0
        %268 = vmatpush.msra.mxu0 0.0
        %269 = vmatpush.msra.mxu0 0.0
        %270 = vmatpush.msra.mxu0 0.0
        %271 = vmatpush.msra.mxu0 0.0
        %272 = vmatpush.msra.mxu0 0.0
        %273 = vmatpush.msra.mxu0 0.0
        %274 = vmatpush.msra.mxu0 0.0
        %275 = vmatpush.msra.mxu0 0.0
        %276 = vmatpush.msra.mxu0 0.0
        %277 = vmatpush.msra.mxu0 0.0
        %278 = vmatpush.msra.mxu0 0.0
        %279 = vmatpush.msra.mxu0 0.0
        %280 = vmatpush.msra.mxu0 0.0
        %281 = vmatpush.msra.mxu0 %v257
        %282 = vmatmul.f32.gmra.mxu0 %v264
        %v283 = vpop.f32.mrf.mxu0
        %v284 = vadd.f32 %v260, %v283
        %285 = vdwg.mxu0
        %286 = vst [vmem:[%s255] sm:$0xff] %v284
        %s287 = sand.u32 %s121, 1
        %s288 = scalar_lea.sflag [#allocation4], %s287
        %s289 = sand.u32 %s121, 1
        %s290 = smul.addr %s289, 8
        %s291 = scalar_lea.vmem [#allocation8], %s290
        // Predicated region
        $region45: #{tpu_custom_call.1} parent=31 // pred_check
          %p292 = pneg %p131
        $region46: #{tpu_custom_call.1} parent=31 // pred_check_branch
          %294 = sbr.rel (%p292) target = $region48
        $region47: #{tpu_custom_call.1} parent=31 // pred_region
          %296 = vsyncadd %s288, 0
          %s297 = smul.addr %s26, 2
          %s298 = sadd.s32 %s25, %s297
          %s299 = smul.addr %s298, 8
          %s300 = scalar_lea.hbm %s3, %s299
          %s302 = sshll.u32 %s291, 4
          %s303 = int_to_ptr.vmem [resolvable:$true] %s302
          %s304 = sshll.u32 %s300, 4
          %s305 = int_to_ptr.hbm [resolvable:$true] %s304
          %307 = dma.vmem_to_hbm [thread:$0]  %s303, 128, %s305, %s288
        $region48: #{tpu_custom_call.1} parent=31 // pred_fallthru
          _
      $region32: #{tpu_custom_call.1} parent=5 // pred_fallthru
        _
      %p308 = scmp.le.s32.totalorder 2, %s16
      // Predicated region
      $region49: #{tpu_custom_call.1} parent=5 // pred_check
        %p309 = pneg %p308
      $region50: #{tpu_custom_call.1} parent=5 // pred_check_branch
        %311 = sbr.rel (%p309) target = $region52
      $region51: #{tpu_custom_call.1} parent=5 // pred_region
        %s312 = ssub.s32 %s16, 2
        // Predicated region
        $region53: #{tpu_custom_call.1} parent=51 // pred_check
          %p313 = pneg %p137
        $region54: #{tpu_custom_call.1} parent=51 // pred_check_branch
          %315 = sbr.rel (%p313) target = $region56
        $region55: #{tpu_custom_call.1} parent=51 // pred_region
          %s316 = sand.u32 %s122, 1
          %s317 = scalar_lea.sflag [#allocation4], %s316
          %s318 = sand.u32 %s122, 1
          %s319 = smul.addr %s318, 8
          %s320 = scalar_lea.vmem [#allocation8], %s319
          %322 = dma.done %s317, 128
        $region56: #{tpu_custom_call.1} parent=51 // pred_fallthru
          _
      $region52: #{tpu_custom_call.1} parent=5 // pred_fallthru
        _
    $region6: #{tpu_custom_call.1} parent=1 // loop_footer
      %s20 = sadd.s32 1, %s16
    $region7: #{tpu_custom_call.1} parent=1 // loop_footer_branch
      %15 = sbr.rel target = $region3
    $region8: #{tpu_custom_call.1} parent=1 // loop_exit
      _
    %323 = vsyncpa [#allocation3], 1
    %s324 = scalar_lea.sflag [#allocation3], 1
    %325 = vsyncpa %s324, 1
    %326 = vsyncpa [#allocation6], 1
    %s327 = scalar_lea.sflag [#allocation6], 1
    %328 = vsyncpa %s327, 1
    %329 = vsyncpa [#allocation4], 1
    %s330 = scalar_lea.sflag [#allocation4], 1
    %331 = vsyncpa %s330, 1

</llo_original>
